<compile_context>
chip_gen: v6e
topology: v6e:2x2x1
jax: 0.10.0
libtpu: 0.0.40
codegen_flags: <defaults>
</compile_context>

<pallas_src>
import functools

import numpy as np
import jax
import jax.numpy as jnp
from jax.experimental import pallas as pl
from jax.experimental.pallas import tpu as pltpu

_INV_LN2 = 1.4426950408889634  # 1 / ln(2)


# ----------------------------------------------------------------------------
# Pass 1: single-step global min / inverse-range over the whole tensor.
# Emits s0 = [[min, 1/(max-min)]] (shape (1, 2)); all math kept on (1,1) vectors.
# ----------------------------------------------------------------------------
def _stats_kernel(x_ref, s_ref):
    x = x_ref[...]                                                    # (R, 128)
    mn = jnp.min(jnp.min(x, axis=1, keepdims=True), axis=0, keepdims=True)   # (1, 1)
    mx = jnp.max(jnp.max(x, axis=1, keepdims=True), axis=0, keepdims=True)   # (1, 1)
    rng = mx - mn
    inv = jnp.where(rng > 0.0, 1.0 / rng, 0.0)                        # (1, 1)
    s_ref[:, 0:1] = mn
    s_ref[:, 1:2] = inv


# ----------------------------------------------------------------------------
# Pass 2: fused normalize_in_range + adjust_log + CLAHE for one (n, c) image.
#   s_ref (SMEM, scalar prefetch): [global_min, 1/(global_max - global_min)]
#   member_ref : (GT, HW) bf16 0/1 tile-membership constant (fetched once)
#   wfull_ref  : (GT, HW) f32 per-pixel bilinear tile weights, 1/(nb-1) folded in
# Also emits per-image min/max of the equalized result for the final normalize.
# ----------------------------------------------------------------------------
def _clahe_kernel(s_ref, x_ref, member_ref, wfull_ref, o_ref, mn_ref, mx_ref,
                  *, nb, clip_val, tile_pixels, gain):
    hw = x_ref.shape[2]
    gt = member_ref.shape[0]

    # ---- fused prologue: normalize_in_range(x, 0, 1) + adjust_log(gain) ----
    x = x_ref[0]                                                      # (1, HW)
    xn = (x - s_ref[0]) * s_ref[1]
    xl = jnp.clip(gain * _INV_LN2 * jnp.log(1.0 + xn), 0.0, 1.0)

    # ---- per-pixel histogram bin (torch.histc(bins=nb, min=0, max=1) convention) ----
    bins = jnp.clip(jnp.floor(xl * nb), 0.0, nb - 1.0).astype(jnp.int32)     # (1, HW)
    bin_iota = jax.lax.broadcasted_iota(jnp.int32, (nb, hw), 0)
    # f32 select, single cast to bf16 at the matmul input (0/1 exact in bf16)
    onehot = jnp.where(bin_iota == bins, 1.0, 0.0).astype(jnp.bfloat16)      # (NB, HW)

    # ---- per-tile histograms on the MXU (contract over HW) ----
    hist = jax.lax.dot_general(member_ref[...], onehot, (((1,), (1,)), ((), ())),
                               preferred_element_type=jnp.float32)           # (GT, NB)

    # ---- clip limit, then CDF via log-step shift-add prefix sum (no f32 matmul) ----
    hist = jnp.minimum(hist, clip_val)
    cum = hist
    step = 1
    while step < nb:                                                  # 8 unrolled steps for nb=256
        shifted = jnp.concatenate(
            [jnp.zeros((gt, step), jnp.float32), cum[:, :nb - step]], axis=1)
        cum = cum + shifted
        step *= 2
    # uniform redistribution of the clipped excess as an analytic ramp
    excess = tile_pixels - cum[:, nb - 1:nb]                          # (GT, 1)
    ramp = (jax.lax.broadcasted_iota(jnp.int32, (gt, nb), 1).astype(jnp.float32)
            + 1.0) * (excess * (1.0 / nb))
    cdf = cum + ramp
    lut = jnp.floor(jnp.clip(cdf * ((nb - 1.0) / tile_pixels), 0.0, nb - 1.0))

    # ---- per-pixel LUT lookup on the MXU (integer-valued bf16 LUT x 0/1 one-hot: exact) ----
    mapped = jnp.dot(lut.astype(jnp.bfloat16), onehot,
                     preferred_element_type=jnp.float32)              # (GT, HW)

    # ---- fused bilinear blend: one multiply + one sublane reduction ----
    res = jnp.sum(mapped * wfull_ref[...], axis=0, keepdims=True)     # (1, HW) in [0, 1]

    o_ref[...] = res.reshape(o_ref.shape)
    mn_ref[...] = jnp.broadcast_to(jnp.min(res, axis=1, keepdims=True),
                                   (1, 128)).reshape(mn_ref.shape)
    mx_ref[...] = jnp.broadcast_to(jnp.max(res, axis=1, keepdims=True),
                                   (1, 128)).reshape(mx_ref.shape)


# ----------------------------------------------------------------------------
# Pass 3: single-step final normalize_in_range(x, 0, 1).
# Reduces the per-image min/max emitted by pass 2 to global scalars in-kernel.
# ----------------------------------------------------------------------------
def _finalize_kernel(x_ref, mn_ref, mx_ref, o_ref):
    gmn = jnp.min(jnp.min(mn_ref[...], axis=1, keepdims=True), axis=0, keepdims=True)
    gmx = jnp.max(jnp.max(mx_ref[...], axis=1, keepdims=True), axis=0, keepdims=True)
    rng = gmx - gmn
    inv = jnp.where(rng > 0.0, 1.0 / rng, 0.0)                        # (1, 1)
    o_ref[...] = (x_ref[...] - gmn) * inv


# ----------------------------------------------------------------------------
# Host-side constants for CLAHE: tile membership and fused bilinear blend weights.
# ----------------------------------------------------------------------------
def _clahe_constants(h, w, gh, gw, nb):
    th, tw = h // gh, w // gw
    r = np.arange(h)
    c = np.arange(w)
    tile_idx = ((r[:, None] // th) * gw + (c[None, :] // tw)).reshape(1, h * w)
    member = (np.arange(gh * gw)[:, None] == tile_idx).astype(np.float32)    # (GT, HW)

    def axis_w(n, t, g):
        gpos = (np.arange(n) + 0.5) / t - 0.5
        i0 = np.floor(gpos).astype(np.int64)
        w1 = (gpos - i0).astype(np.float32)
        w0 = 1.0 - w1
        i0c = np.clip(i0, 0, g - 1)
        i1c = np.clip(i0 + 1, 0, g - 1)
        out = np.zeros((n, g), np.float32)
        np.add.at(out, (np.arange(n), i0c), w0)
        np.add.at(out, (np.arange(n), i1c), w1)
        return out                                                     # (n, g), rows sum to 1

    wy = axis_w(h, th, gh)                                             # (H, GH)
    wx = axis_w(w, tw, gw)                                             # (W, GW)
    # wfull[gy*gw+gx, row*w+col] = wy[row, gy] * wx[col, gx] / (nb - 1)
    wfull = (wy[:, None, :, None] * wx[None, :, None, :])              # (H, W, GH, GW)
    wfull = wfull.transpose(2, 3, 0, 1).reshape(gh * gw, h * w) / (nb - 1.0)
    return jnp.asarray(member, jnp.bfloat16), jnp.asarray(wfull, jnp.float32)


# ----------------------------------------------------------------------------
# Wrapper reproducing AaronUnetTrainAug.forward on a tuple.
# ----------------------------------------------------------------------------
def aaron_unet_train_aug(t, log_gain=2.5, clahe_clip_limit=40.0, grid_size=(8, 8)):
    x = t[0]
    n, c, h, w = x.shape                       # get_shape(x); 4D so the final reshape is a no-op
    gh, gw = grid_size
    assert h % gh == 0 and w % gw == 0 and (h * w) % 128 == 0
    th, tw = h // gh, w // gw
    nb = 256
    tile_pixels = th * tw
    clip_val = float(max(clahe_clip_limit * tile_pixels // nb, 1))     # kornia clip formula
    nc = n * c
    hw = h * w
    sub = hw // 128
    gt = gh * gw

    x = x.astype(jnp.float32)
    x2d = x.reshape(nc * sub, 128)             # lane-dense view for the stats pass
    x_flat = x.reshape(nc, 1, hw)              # flattened per-image view for CLAHE

    # ---- pass 1: single-step global [min, 1/range] for normalize_in_range ----
    s0 = pl.pallas_call(
        _stats_kernel,
        out_shape=jax.ShapeDtypeStruct((1, 2), jnp.float32),
        in_specs=[pl.BlockSpec(memory_space=pltpu.MemorySpace.VMEM)],
        out_specs=pl.BlockSpec(memory_space=pltpu.MemorySpace.VMEM),
    )(x2d).reshape(2)

    # ---- pass 2: fused normalize + adjust_log + CLAHE, one grid step per (n, c) image ----
    member, wfull = _clahe_constants(h, w, gh, gw, nb)
    eq, mn1, mx1 = pl.pallas_call(
        functools.partial(_clahe_kernel, nb=nb, clip_val=clip_val,
                          tile_pixels=float(tile_pixels), gain=float(log_gain)),
        out_shape=(jax.ShapeDtypeStruct((nc, 1, hw), jnp.float32),
                   jax.ShapeDtypeStruct((nc, 1, 128), jnp.float32),
                   jax.ShapeDtypeStruct((nc, 1, 128), jnp.float32)),
        grid_spec=pltpu.PrefetchScalarGridSpec(
            num_scalar_prefetch=1,
            grid=(nc,),
            in_specs=[pl.BlockSpec((1, 1, hw), lambda i, s: (i, 0, 0)),
                      pl.BlockSpec((gt, hw), lambda i, s: (0, 0)),     # constant: fetched once
                      pl.BlockSpec((gt, hw), lambda i, s: (0, 0))],    # constant: fetched once
            out_specs=[pl.BlockSpec((1, 1, hw), lambda i, s: (i, 0, 0)),
                       pl.BlockSpec((1, 1, 128), lambda i, s: (i, 0, 0)),
                       pl.BlockSpec((1, 1, 128), lambda i, s: (i, 0, 0))]),
        compiler_params=pltpu.CompilerParams(dimension_semantics=("parallel",)),
    )(s0, x_flat, member, wfull)

    # ---- pass 3: single-step final normalize_in_range(x, 0, 1) ----
    out = pl.pallas_call(
        _finalize_kernel,
        out_shape=jax.ShapeDtypeStruct((nc * sub, 128), jnp.float32),
        in_specs=[pl.BlockSpec(memory_space=pltpu.MemorySpace.VMEM)] * 3,
        out_specs=pl.BlockSpec(memory_space=pltpu.MemorySpace.VMEM),
    )(eq.reshape(nc * sub, 128), mn1.reshape(nc, 128), mx1.reshape(nc, 128))

    out = out.reshape(n, c, h, w)              # x.reshape(shape): restore NCHW
    # TODO(synk): self.b_blur / self.g_blur are never defined in AaronUnetTrainAug.__init__
    # (no kernel size / sigma available), so the blur stages are skipped; the trailing
    # normalize_in_range(x, 0, 1) is then exactly the normalization applied in pass 3.
    l = list(t)
    l[0] = out
    return tuple(l)


if __name__ == "__main__":
    key = jax.random.PRNGKey(0)
    k1, k2 = jax.random.split(key)
    # batch=2, channels=4, spatial=64 (divisible by the 8x8 CLAHE grid, H*W % 128 == 0)
    x = jax.random.uniform(k1, (2, 4, 64, 64), dtype=jnp.float32)
    aux = jax.random.normal(k2, (2, 8), dtype=jnp.float32)   # extra tuple element, passed through

    result = aaron_unet_train_aug((x, aux), log_gain=2.5, clahe_clip_limit=40.0)
    jax.block_until_ready(result[0])

    assert result[0].shape == x.shape and result[0].dtype == jnp.float32
    assert result[1] is aux
    assert bool(jnp.isfinite(result[0]).all())
    assert bool((result[0] >= -1e-5).all()) and bool((result[0] <= 1.0 + 1e-5).all())
    print("KERNEL_OK")
</pallas_src>

<mosaic_0001>
module attributes {stable_mosaic.version = 11 : i64} {
  func.func @_stats_kernel(%arg0: memref<256x128xf32, #tpu.memory_space<vmem>>, %arg1: memref<1x2xf32, #tpu.memory_space<vmem>>) attributes {dimension_semantics = [], scalar_prefetch = 0 : i64, scratch_operands = 0 : i64, tpu.core_type = #tpu.core_type<tc>} {
    %c0 = arith.constant 0 : index
    %c0_0 = arith.constant 0 : index
    %0 = vector.load %arg0[%c0, %c0_0] : memref<256x128xf32, #tpu.memory_space<vmem>>, vector<256x128xf32>
    %cst = arith.constant dense<0x7F800000> : vector<256xf32>
    %1 = vector.multi_reduction <minimumf>, %0, %cst [1] : vector<256x128xf32> to vector<256xf32>
    %2 = vector.shape_cast %1 : vector<256xf32> to vector<256x1xf32>
    %cst_1 = arith.constant dense<0x7F800000> : vector<1xf32>
    %3 = vector.multi_reduction <minimumf>, %2, %cst_1 [0] : vector<256x1xf32> to vector<1xf32>
    %4 = vector.shape_cast %3 : vector<1xf32> to vector<1x1xf32>
    %cst_2 = arith.constant dense<0xFF800000> : vector<256xf32>
    %5 = vector.multi_reduction <maximumf>, %0, %cst_2 [1] : vector<256x128xf32> to vector<256xf32>
    %6 = vector.shape_cast %5 : vector<256xf32> to vector<256x1xf32>
    %cst_3 = arith.constant dense<0xFF800000> : vector<1xf32>
    %7 = vector.multi_reduction <maximumf>, %6, %cst_3 [0] : vector<256x1xf32> to vector<1xf32>
    %8 = vector.shape_cast %7 : vector<1xf32> to vector<1x1xf32>
    %9 = arith.subf %8, %4 : vector<1x1xf32>
    %cst_4 = arith.constant 0.000000e+00 : f32
    %10 = vector.broadcast %cst_4 : f32 to vector<1x1xf32>
    %11 = arith.cmpf ogt, %9, %10 : vector<1x1xf32>
    %cst_5 = arith.constant 1.000000e+00 : f32
    %12 = vector.broadcast %cst_5 : f32 to vector<1x1xf32>
    %13 = arith.divf %12, %9 : vector<1x1xf32>
    %cst_6 = arith.constant 0.000000e+00 : f32
    %14 = vector.broadcast %cst_6 : f32 to vector<1x1xf32>
    %15 = arith.select %11, %13, %14 : vector<1x1xi1>, vector<1x1xf32>
    %c0_7 = arith.constant 0 : index
    %c0_8 = arith.constant 0 : index
    %16 = vector.load %arg1[%c0_7, %c0_8] : memref<1x2xf32, #tpu.memory_space<vmem>>, vector<1x1xf32>
    tpu.vector_store %arg1[%c0_7, %c0_8], %4 {strides = array<i32>} : memref<1x2xf32, #tpu.memory_space<vmem>>, vector<1x1xf32>,
    %c0_9 = arith.constant 0 : index
    %c1 = arith.constant 1 : index
    %17 = vector.load %arg1[%c0_9, %c1] : memref<1x2xf32, #tpu.memory_space<vmem>>, vector<1x1xf32>
    tpu.vector_store %arg1[%c0_9, %c1], %15 {strides = array<i32>} : memref<1x2xf32, #tpu.memory_space<vmem>>, vector<1x1xf32>,
    return
  }
}

</mosaic_0001>

<llo_original>
// kernel: tpu_custom_call.1
$region0: #{tpu_custom_call.1}
  #allocation0 [shape = 'u32[]', space=smem, size = 0x4, offset = 0x4, fixed_abs, tag = 'smem constant byte address 0x4 - core index']
  #allocation1 [shape = 'u32[144,128]{1,0:T(1,128)}', space=vmem, size = 0x12000, scoped, tag = 'internal scratch']
  %s0 = inlined_call_operand.hbm [shape: f32[256,128], index: 0, kind: input, shape index: {}]
  %s1 = inlined_call_operand.hbm [shape: f32[1,2], index: 1, kind: output, shape index: {}]
  %s2 = sld [smem:[#allocation0]]
  $region18: #{tpu_custom_call.1} parent=0
    _
  %s4 = ssub.s32 1, %s2
  %s5 = scalar_select 0, %s4, %s2
  $region1: #{tpu_custom_call.1} parent=0
    #allocation2 [shape = 'u8[131072]{0}', space=vmem, size = 0x20000, scoped, tag = 'input window, operand 0, single buffered']
    #allocation3 [shape = 's32[1]{0}', space=sflag, size = 0x4, scoped, tag = 'scoped memory for tpu_custom_call.1']
    #allocation4 [shape = 's32[1]{0}', space=sflag, size = 0x4, scoped, tag = 'scoped memory for tpu_custom_call.1']
    #allocation5 [shape = 'u8[512]{0}', space=vmem, size = 0x400, scoped, tag = 'output window, operand 0, single buffered']
    %6 = vsyncpa [#allocation3], 0
    %7 = vsyncpa [#allocation4], 0
    // Predicated region
    $region2: #{tpu_custom_call.1} parent=1 // pred_check
      _
    $region3: #{tpu_custom_call.1} parent=1 // pred_check_branch
      %9 = sbr.rel (0) target = $region5
    $region4: #{tpu_custom_call.1} parent=1 // pred_region
      %s11 = ssub.s32 4096, 4096
      %12 = vsyncadd [#allocation3], %s11
      %s13 = sshll.u32 [#allocation2], 4
      %s14 = int_to_ptr.vmem [resolvable:$true] %s13
      %19 = dma.hbm_to_vmem [thread:$0]  %s0, 4096, %s14, [#allocation3], 128, 128, 8
    $region5: #{tpu_custom_call.1} parent=1 // pred_fallthru
      _
    // Predicated region
    $region6: #{tpu_custom_call.1} parent=1 // pred_check
      _
    $region7: #{tpu_custom_call.1} parent=1 // pred_check_branch
      %21 = sbr.rel (0) target = $region9
    $region8: #{tpu_custom_call.1} parent=1 // pred_region
      %22 = dma.done [#allocation3], 4096
    $region9: #{tpu_custom_call.1} parent=1 // pred_fallthru
      _
    %v23 = vld [vmem:[#allocation2] sm:$0xff]
    %v24 = vld [vmem:[#allocation2 + $0x8] sm:$0xff]
    %v25 = vld [vmem:[#allocation2 + $0x10] sm:$0xff]
    %v26 = vld [vmem:[#allocation2 + $0x18] sm:$0xff]
    %v27 = vld [vmem:[#allocation2 + $0x20] sm:$0xff]
    %v28 = vld [vmem:[#allocation2 + $0x28] sm:$0xff]
    %v29 = vld [vmem:[#allocation2 + $0x30] sm:$0xff]
    %v30 = vld [vmem:[#allocation2 + $0x38] sm:$0xff]
    %v31 = vld [vmem:[#allocation2 + $0x40] sm:$0xff]
    %v32 = vld [vmem:[#allocation2 + $0x48] sm:$0xff]
    %v33 = vld [vmem:[#allocation2 + $0x50] sm:$0xff]
    %v34 = vld [vmem:[#allocation2 + $0x58] sm:$0xff]
    %v35 = vld [vmem:[#allocation2 + $0x60] sm:$0xff]
    %v36 = vld [vmem:[#allocation2 + $0x68] sm:$0xff]
    %v37 = vld [vmem:[#allocation2 + $0x70] sm:$0xff]
    %v38 = vld [vmem:[#allocation2 + $0x78] sm:$0xff]
    %v39 = vld [vmem:[#allocation2 + $0x80] sm:$0xff]
    %v40 = vld [vmem:[#allocation2 + $0x88] sm:$0xff]
    %v41 = vld [vmem:[#allocation2 + $0x90] sm:$0xff]
    %v42 = vld [vmem:[#allocation2 + $0x98] sm:$0xff]
    %v43 = vld [vmem:[#allocation2 + $0xa0] sm:$0xff]
    %v44 = vld [vmem:[#allocation2 + $0xa8] sm:$0xff]
    %v45 = vld [vmem:[#allocation2 + $0xb0] sm:$0xff]
    %v46 = vld [vmem:[#allocation2 + $0xb8] sm:$0xff]
    %v47 = vld [vmem:[#allocation2 + $0xc0] sm:$0xff]
    %v48 = vld [vmem:[#allocation2 + $0xc8] sm:$0xff]
    %v49 = vld [vmem:[#allocation2 + $0xd0] sm:$0xff]
    %v50 = vld [vmem:[#allocation2 + $0xd8] sm:$0xff]
    %v51 = vld [vmem:[#allocation2 + $0xe0] sm:$0xff]
    %v52 = vld [vmem:[#allocation2 + $0xe8] sm:$0xff]
    %v53 = vld [vmem:[#allocation2 + $0xf0] sm:$0xff]
    %v54 = vld [vmem:[#allocation2 + $0xf8] sm:$0xff]
    %55 = vmin.xlane.f32.xlu0 %v23
    %v56 = vpop.xlane.xlu0 %55
    %57 = vmin.xlane.f32.xlu0 %v24
    %v58 = vpop.xlane.xlu0 %57
    %59 = vmin.xlane.f32.xlu0 %v25
    %v60 = vpop.xlane.xlu0 %59
    %61 = vmin.xlane.f32.xlu0 %v26
    %v62 = vpop.xlane.xlu0 %61
    %63 = vmin.xlane.f32.xlu0 %v27
    %v64 = vpop.xlane.xlu0 %63
    %65 = vmin.xlane.f32.xlu0 %v28
    %v66 = vpop.xlane.xlu0 %65
    %67 = vmin.xlane.f32.xlu0 %v29
    %v68 = vpop.xlane.xlu0 %67
    %69 = vmin.xlane.f32.xlu0 %v30
    %v70 = vpop.xlane.xlu0 %69
    %71 = vmin.xlane.f32.xlu0 %v31
    %v72 = vpop.xlane.xlu0 %71
    %73 = vmin.xlane.f32.xlu0 %v32
    %v74 = vpop.xlane.xlu0 %73
    %75 = vmin.xlane.f32.xlu0 %v33
    %v76 = vpop.xlane.xlu0 %75
    %77 = vmin.xlane.f32.xlu0 %v34
    %v78 = vpop.xlane.xlu0 %77
    %79 = vmin.xlane.f32.xlu0 %v35
    %v80 = vpop.xlane.xlu0 %79
    %81 = vmin.xlane.f32.xlu0 %v36
    %v82 = vpop.xlane.xlu0 %81
    %83 = vmin.xlane.f32.xlu0 %v37
    %v84 = vpop.xlane.xlu0 %83
    %85 = vmin.xlane.f32.xlu0 %v38
    %v86 = vpop.xlane.xlu0 %85
    %87 = vmin.xlane.f32.xlu0 %v39
    %v88 = vpop.xlane.xlu0 %87
    %89 = vmin.xlane.f32.xlu0 %v40
    %v90 = vpop.xlane.xlu0 %89
    %91 = vmin.xlane.f32.xlu0 %v41
    %v92 = vpop.xlane.xlu0 %91
    %93 = vmin.xlane.f32.xlu0 %v42
    %v94 = vpop.xlane.xlu0 %93
    %95 = vmin.xlane.f32.xlu0 %v43
    %v96 = vpop.xlane.xlu0 %95
    %97 = vmin.xlane.f32.xlu0 %v44
    %v98 = vpop.xlane.xlu0 %97
    %99 = vmin.xlane.f32.xlu0 %v45
    %v100 = vpop.xlane.xlu0 %99
    %101 = vmin.xlane.f32.xlu0 %v46
    %v102 = vpop.xlane.xlu0 %101
    %103 = vmin.xlane.f32.xlu0 %v47
    %v104 = vpop.xlane.xlu0 %103
    %105 = vmin.xlane.f32.xlu0 %v48
    %v106 = vpop.xlane.xlu0 %105
    %107 = vmin.xlane.f32.xlu0 %v49
    %v108 = vpop.xlane.xlu0 %107
    %109 = vmin.xlane.f32.xlu0 %v50
    %v110 = vpop.xlane.xlu0 %109
    %111 = vmin.xlane.f32.xlu0 %v51
    %v112 = vpop.xlane.xlu0 %111
    %113 = vmin.xlane.f32.xlu0 %v52
    %v114 = vpop.xlane.xlu0 %113
    %115 = vmin.xlane.f32.xlu0 %v53
    %v116 = vpop.xlane.xlu0 %115
    %117 = vmin.xlane.f32.xlu0 %v54
    %v118 = vpop.xlane.xlu0 %117
    %v119 = vmin.f32 %v56, %v64
    %v120 = vmin.f32 %v58, %v66
    %v121 = vmin.f32 %v60, %v68
    %v122 = vmin.f32 %v62, %v70
    %v123 = vmin.f32 %v119, %v72
    %v124 = vmin.f32 %v120, %v74
    %v125 = vmin.f32 %v121, %v76
    %v126 = vmin.f32 %v122, %v78
    %v127 = vmin.f32 %v123, %v80
    %v128 = vmin.f32 %v124, %v82
    %v129 = vmin.f32 %v125, %v84
    %v130 = vmin.f32 %v126, %v86
    %v131 = vmin.f32 %v127, %v88
    %v132 = vmin.f32 %v128, %v90
    %v133 = vmin.f32 %v129, %v92
    %v134 = vmin.f32 %v130, %v94
    %v135 = vmin.f32 %v131, %v96
    %v136 = vmin.f32 %v132, %v98
    %v137 = vmin.f32 %v133, %v100
    %v138 = vmin.f32 %v134, %v102
    %v139 = vmin.f32 %v135, %v104
    %v140 = vmin.f32 %v136, %v106
    %v141 = vmin.f32 %v137, %v108
    %v142 = vmin.f32 %v138, %v110
    %v143 = vmin.f32 %v139, %v112
    %v144 = vmin.f32 %v140, %v114
    %v145 = vmin.f32 %v141, %v116
    %v146 = vmin.f32 %v142, %v118
    %v147 = vmin.f32 %v143, %v144
    %v148 = vmin.f32 %v145, %v146
    %v149 = vmin.f32 %v147, %v148
    %v150 = vrot.slane %v149, 4
    %v151 = vmin.f32 %v149, %v150
    %v152 = vrot.slane %v151, 2
    %v153 = vmin.f32 %v151, %v152
    %v154 = vrot.slane %v153, 1
    %v155 = vmin.f32 %v153, %v154
    %156 = vmax.xlane.f32.xlu0 %v23
    %v157 = vpop.xlane.xlu0 %156
    %158 = vmax.xlane.f32.xlu0 %v24
    %v159 = vpop.xlane.xlu0 %158
    %160 = vmax.xlane.f32.xlu0 %v25
    %v161 = vpop.xlane.xlu0 %160
    %162 = vmax.xlane.f32.xlu0 %v26
    %v163 = vpop.xlane.xlu0 %162
    %164 = vmax.xlane.f32.xlu0 %v27
    %v165 = vpop.xlane.xlu0 %164
    %166 = vmax.xlane.f32.xlu0 %v28
    %v167 = vpop.xlane.xlu0 %166
    %168 = vmax.xlane.f32.xlu0 %v29
    %v169 = vpop.xlane.xlu0 %168
    %170 = vmax.xlane.f32.xlu0 %v30
    %v171 = vpop.xlane.xlu0 %170
    %172 = vmax.xlane.f32.xlu0 %v31
    %v173 = vpop.xlane.xlu0 %172
    %174 = vmax.xlane.f32.xlu0 %v32
    %v175 = vpop.xlane.xlu0 %174
    %176 = vmax.xlane.f32.xlu0 %v33
    %v177 = vpop.xlane.xlu0 %176
    %178 = vmax.xlane.f32.xlu0 %v34
    %v179 = vpop.xlane.xlu0 %178
    %180 = vmax.xlane.f32.xlu0 %v35
    %v181 = vpop.xlane.xlu0 %180
    %182 = vmax.xlane.f32.xlu0 %v36
    %v183 = vpop.xlane.xlu0 %182
    %184 = vmax.xlane.f32.xlu0 %v37
    %v185 = vpop.xlane.xlu0 %184
    %186 = vmax.xlane.f32.xlu0 %v38
    %v187 = vpop.xlane.xlu0 %186
    %188 = vmax.xlane.f32.xlu0 %v39
    %v189 = vpop.xlane.xlu0 %188
    %190 = vmax.xlane.f32.xlu0 %v40
    %v191 = vpop.xlane.xlu0 %190
    %192 = vmax.xlane.f32.xlu0 %v41
    %v193 = vpop.xlane.xlu0 %192
    %194 = vmax.xlane.f32.xlu0 %v42
    %v195 = vpop.xlane.xlu0 %194
    %196 = vmax.xlane.f32.xlu0 %v43
    %v197 = vpop.xlane.xlu0 %196
    %198 = vmax.xlane.f32.xlu0 %v44
    %v199 = vpop.xlane.xlu0 %198
    %200 = vmax.xlane.f32.xlu0 %v45
    %v201 = vpop.xlane.xlu0 %200
    %202 = vmax.xlane.f32.xlu0 %v46
    %v203 = vpop.xlane.xlu0 %202
    %204 = vmax.xlane.f32.xlu0 %v47
    %v205 = vpop.xlane.xlu0 %204
    %206 = vmax.xlane.f32.xlu0 %v48
    %v207 = vpop.xlane.xlu0 %206
    %208 = vmax.xlane.f32.xlu0 %v49
    %v209 = vpop.xlane.xlu0 %208
    %210 = vmax.xlane.f32.xlu0 %v50
    %v211 = vpop.xlane.xlu0 %210
    %212 = vmax.xlane.f32.xlu0 %v51
    %v213 = vpop.xlane.xlu0 %212
    %214 = vmax.xlane.f32.xlu0 %v52
    %v215 = vpop.xlane.xlu0 %214
    %216 = vmax.xlane.f32.xlu0 %v53
    %v217 = vpop.xlane.xlu0 %216
    %218 = vmax.xlane.f32.xlu0 %v54
    %v219 = vpop.xlane.xlu0 %218
    %v220 = vmax.f32 %v157, %v165
    %v221 = vmax.f32 %v159, %v167
    %v222 = vmax.f32 %v161, %v169
    %v223 = vmax.f32 %v163, %v171
    %v224 = vmax.f32 %v220, %v173
    %v225 = vmax.f32 %v221, %v175
    %v226 = vmax.f32 %v222, %v177
    %v227 = vmax.f32 %v223, %v179
    %v228 = vmax.f32 %v224, %v181
    %v229 = vmax.f32 %v225, %v183
    %v230 = vmax.f32 %v226, %v185
    %v231 = vmax.f32 %v227, %v187
    %v232 = vmax.f32 %v228, %v189
    %v233 = vmax.f32 %v229, %v191
    %v234 = vmax.f32 %v230, %v193
    %v235 = vmax.f32 %v231, %v195
    %v236 = vmax.f32 %v232, %v197
    %v237 = vmax.f32 %v233, %v199
    %v238 = vmax.f32 %v234, %v201
    %v239 = vmax.f32 %v235, %v203
    %v240 = vmax.f32 %v236, %v205
    %v241 = vmax.f32 %v237, %v207
    %v242 = vmax.f32 %v238, %v209
    %v243 = vmax.f32 %v239, %v211
    %v244 = vmax.f32 %v240, %v213
    %v245 = vmax.f32 %v241, %v215
    %v246 = vmax.f32 %v242, %v217
    %v247 = vmax.f32 %v243, %v219
    %v248 = vmax.f32 %v244, %v245
    %v249 = vmax.f32 %v246, %v247
    %v250 = vmax.f32 %v248, %v249
    %v251 = vrot.slane %v250, 4
    %v252 = vmax.f32 %v250, %v251
    %v253 = vrot.slane %v252, 2
    %v254 = vmax.f32 %v252, %v253
    %v255 = vrot.slane %v254, 1
    %v256 = vmax.f32 %v254, %v255
    %v257 = vsub.f32 %v256, %v155
    %vm258 = vcmp.gt.f32.partialorder %v257, 0.0
    %v259 = vrcp.pop %v257
    %v260 = vmul.f32 1.0, %v259
    %v261 = vsel %vm258, %v260, 0.0
    %vm262 = vcmask 0
    %263 = vst.msk [vmem:[#allocation5] sm:$0x1] %vm262, %v155
    %vm264 = vcmask 8200
    %265 = vst.msk [vmem:[#allocation5] sm:$0x1] %vm264, %v261
    // Predicated region
    $region10: #{tpu_custom_call.1} parent=1 // pred_check
      _
    $region11: #{tpu_custom_call.1} parent=1 // pred_check_branch
      %267 = sbr.rel (0) target = $region13
    $region12: #{tpu_custom_call.1} parent=1 // pred_region
      %s269 = ssub.s32 16, 16
      %270 = vsyncadd [#allocation4], %s269
      %s272 = sshll.u32 [#allocation5], 4
      %s273 = int_to_ptr.vmem [resolvable:$true] %s272
      %275 = dma.vmem_to_hbm [thread:$0]  %s273, 16, %s1, [#allocation4]
    $region13: #{tpu_custom_call.1} parent=1 // pred_fallthru
      _
    // Predicated region
    $region14: #{tpu_custom_call.1} parent=1 // pred_check
      _
    $region15: #{tpu_custom_call.1} parent=1 // pred_check_branch
      %277 = sbr.rel (0) target = $region17
    $region16: #{tpu_custom_call.1} parent=1 // pred_region
      %278 = dma.done [#allocation4], 16
    $region17: #{tpu_custom_call.1} parent=1 // pred_fallthru
      _
    %279 = vsyncpa [#allocation3], 1
    %280 = vsyncpa [#allocation4], 1

</llo_original>
